<compile_context>
chip_gen: v6e
topology: v6e:2x2x1
jax: 0.10.0
libtpu: 0.0.40
codegen_flags: <defaults>
</compile_context>

<pallas_src>
import numpy as np

import jax
import jax.numpy as jnp
from jax import lax
from jax.experimental import pallas as pl
from jax.experimental.pallas import tpu as pltpu


def _polyphase_plan(k, stride, padding):
    """Static polyphase decomposition of ConvTranspose1d (stride-1 view)."""
    pad_l_corr = k - 1 - padding  # left pad of the equivalent stride-1 correlation
    phases = []
    for r in range(stride):
        p_r = (pad_l_corr - r) % stride          # tap parity used by phase r
        base_r = (pad_l_corr - r - p_r) // stride
        kp_r = -(-(k - p_r) // stride)           # ceil((k - p_r) / stride)
        phases.append((p_r, base_r, kp_r))
    base_max = max(b for _, b, _ in phases)
    n_off = max(base_max - b + kp for _, b, kp in phases)  # distinct x offsets
    return phases, base_max, n_off


def upblock_forward(x, w, b, gamma, beta, alpha, *, stride,
                    mxu_dtype=jnp.float32):
    """UpBlock forward.

    x: (N, C_in, L); w: (C_in, C_out, K) (PyTorch ConvTranspose1d layout).
    `b` is accepted for signature parity but unused: the conv bias cancels
    exactly under training-mode BatchNorm (it only shifts the batch mean).
    `mxu_dtype=jnp.bfloat16` feeds the MXU in bf16 (v6e/v7x); accumulation and
    all BN / PReLU math stay float32.
    """
    del b
    n, c_in, l = x.shape
    _, c_out, k = w.shape
    padding = 21 - stride // 2
    output_padding = 1
    l_out = (l - 1) * stride - 2 * padding + k + output_padding
    assert l_out % stride == 0, "polyphase path assumes stride | L_out (even stride)"
    lh = l_out // stride

    phases, base_max, n_off = _polyphase_plan(k, stride, padding)
    lp = lh + n_off - 1
    pad_left = base_max
    pad_right = lp - pad_left - l
    assert pad_right >= 0

    c_in_p = -(-c_in // 8) * 8          # sublane-aligned channel group
    rows = stride * c_out               # stacked (phase, channel) output rows

    # One small pad of the original x: channels -> c_in_p (sublane alignment),
    # length -> lp (polyphase halo).  No zero-dilation, no 2x-length array.
    xp = jnp.pad(x.astype(jnp.float32),
                 ((0, 0), (0, c_in_p - c_in), (pad_left, pad_right)))

    # --- stacked per-phase weight matrix (precompute at param-init in prod) --
    # w_conv[k', co, ci] = w[ci, co, K-1-k']  (flipped / transposed kernel)
    w_conv = jnp.flip(w, axis=2).transpose(2, 1, 0).astype(jnp.float32)
    w_ext = jnp.concatenate(
        [w_conv, jnp.zeros((1, c_out, c_in), jnp.float32)], axis=0)  # row K == 0
    kidx = np.full((stride, n_off), k, dtype=np.int32)
    for r, (p_r, base_r, kp_r) in enumerate(phases):
        for o in range(n_off):
            m = o - (base_max - base_r)
            if 0 <= m < kp_r:
                kidx[r, o] = stride * m + p_r
    wmat = w_ext[kidx]                                  # (stride, n_off, C_out, C_in)
    wmat = wmat.transpose(0, 2, 1, 3)                   # (stride, C_out, n_off, C_in)
    wmat = jnp.pad(wmat, ((0, 0), (0, 0), (0, 0), (0, c_in_p - c_in)))
    wmat = wmat.reshape(rows, n_off * c_in_p).astype(mxu_dtype)

    # gamma / beta / (channel-broadcast) PReLU slope in one tiny VMEM block.
    alpha_c = jnp.broadcast_to(alpha.astype(jnp.float32).reshape(-1), (c_out,))
    prm = jnp.stack(
        [gamma.astype(jnp.float32), beta.astype(jnp.float32), alpha_c], axis=1)

    # TODO(synk): BatchNorm1d running_mean/running_var buffer updates are a
    # training-time side effect and are not represented (output is unaffected).

    def kernel(xp_ref, wmat_ref, prm_ref, o_ref, xcol_ref):
        # ---- im2col (VMEM scratch): xcol[o*C_in_p+ci, bi*Lh+q] = xp[bi,ci,o+q]
        # Each batch row is read from VMEM once; the n_off shifted views are
        # in-register lane slices of that value; every store is a full
        # 8-row-aligned (c_in_p, N*Lh) group.
        xrows = [xp_ref[bi] for bi in range(n)]          # (c_in_p, lp) each
        for o in range(n_off):
            pieces = [xr[:, o:o + lh] for xr in xrows]
            xcol_ref[o * c_in_p:(o + 1) * c_in_p, :] = (
                pieces[0] if n == 1 else jnp.concatenate(pieces, axis=1))

        xcol = xcol_ref[...]                             # (n_off*C_in_p, N*Lh)
        if mxu_dtype != jnp.float32:
            xcol = xcol.astype(mxu_dtype)

        # ---- ConvTranspose1d: ONE fused MXU matmul over all phases ---------
        # y[r*C_out+co, bi*Lh+q] = phase r, channel co, batch bi, coarse pos q
        y = jnp.dot(wmat_ref[...], xcol,
                    preferred_element_type=jnp.float32)  # (rows, N*Lh) f32

        # ---- BatchNorm1d: one-pass training-mode batch stats ---------------
        row_sum = jnp.sum(y, axis=1, keepdims=True)      # (rows, 1)
        row_sq = jnp.sum(y * y, axis=1, keepdims=True)   # (rows, 1)
        ch_sum = row_sum[0:c_out]
        ch_sq = row_sq[0:c_out]
        for r in range(1, stride):                       # combine phase rows
            ch_sum = ch_sum + row_sum[r * c_out:(r + 1) * c_out]
            ch_sq = ch_sq + row_sq[r * c_out:(r + 1) * c_out]
        inv_cnt = 1.0 / float(n * l_out)
        mean = ch_sum * inv_cnt
        var = ch_sq * inv_cnt - mean * mean              # E[y^2] - mean^2

        gamma_v = prm_ref[:, 0:1]
        beta_v = prm_ref[:, 1:2]
        slope_v = prm_ref[:, 2:3]
        scale_c = gamma_v * lax.rsqrt(var + 1e-5)        # (C_out, 1)
        shift_c = beta_v - scale_c * mean

        if stride > 1:                                   # tile back to all rows
            scale = jnp.concatenate([scale_c] * stride, axis=0)
            shift = jnp.concatenate([shift_c] * stride, axis=0)
            slope = jnp.concatenate([slope_v] * stride, axis=0)
        else:
            scale, shift, slope = scale_c, shift_c, slope_v

        # ---- fused BN affine + PReLU, single dense store --------------------
        z = y * scale + shift
        o_ref[...] = jnp.where(z >= 0.0, z, slope * z)

    vmem = pl.BlockSpec(memory_space=pltpu.MemorySpace.VMEM)
    y = pl.pallas_call(
        kernel,
        out_shape=jax.ShapeDtypeStruct((rows, n * lh), jnp.float32),
        in_specs=[vmem, vmem, vmem],
        out_specs=vmem,
        scratch_shapes=[pltpu.VMEM((n_off * c_in_p, n * lh), jnp.float32)],
        compiler_params=pltpu.CompilerParams(vmem_limit_bytes=32 * 1024 * 1024),
    )(xp, wmat, prm)

    # Layout plumbing only (no compute):
    # y[r*C_out + co, bi*Lh + q]  ->  out[bi, co, stride*q + r].
    return (y.reshape(stride, c_out, n, lh)
             .transpose(2, 1, 3, 0)
             .reshape(n, c_out, l_out))


def upblock_reference(x, w, b, gamma, beta, alpha, *, stride):
    """Pure-JAX reference (XLA conv) for correctness checking."""
    n, c_in, l = x.shape
    _, c_out, k = w.shape
    padding = 21 - stride // 2
    output_padding = 1
    rhs = jnp.flip(w, axis=2).transpose(1, 0, 2)          # (C_out, C_in, K)
    y = lax.conv_general_dilated(
        x, rhs, window_strides=(1,),
        padding=[(k - 1 - padding, k - 1 - padding + output_padding)],
        lhs_dilation=(stride,),
        dimension_numbers=('NCH', 'OIH', 'NCH'))
    y = y + b.reshape(1, c_out, 1)
    mean = jnp.mean(y, axis=(0, 2), keepdims=True)
    var = jnp.mean((y - mean) ** 2, axis=(0, 2), keepdims=True)
    y = gamma.reshape(1, c_out, 1) * (y - mean) * lax.rsqrt(var + 1e-5) \
        + beta.reshape(1, c_out, 1)
    return jnp.where(y >= 0, y, alpha.reshape(1, 1, 1) * y)


if __name__ == "__main__":
    N, C_IN, C_OUT, L, STRIDE, K = 2, 4, 4, 16, 2, 41

    key = jax.random.PRNGKey(0)
    kx, kw, kb = jax.random.split(key, 3)
    x = jax.random.normal(kx, (N, C_IN, L), jnp.float32)

    # ConvTranspose1d params (PyTorch weight layout (in, out, K)).
    fan = C_OUT * K
    w = jax.random.uniform(kw, (C_IN, C_OUT, K), jnp.float32, -1.0, 1.0) / jnp.sqrt(fan)
    b = jax.random.uniform(kb, (C_OUT,), jnp.float32, -1.0, 1.0) / jnp.sqrt(fan)
    # BatchNorm1d / PReLU defaults from the module __init__.
    gamma = jnp.ones((C_OUT,), jnp.float32)
    beta = jnp.zeros((C_OUT,), jnp.float32)
    alpha = jnp.full((1,), 0.25, jnp.float32)

    l_out = (L - 1) * STRIDE - 2 * (21 - STRIDE // 2) + K + 1

    # f32 MXU path: strict check against the pure-JAX reference.
    out = upblock_forward(x, w, b, gamma, beta, alpha, stride=STRIDE)
    out = jax.block_until_ready(out)
    assert out.shape == (N, C_OUT, l_out), out.shape
    ref = upblock_reference(x, w, b, gamma, beta, alpha, stride=STRIDE)
    max_err = float(jnp.max(jnp.abs(out - ref)))
    assert jnp.allclose(out, ref, rtol=2e-4, atol=2e-4), max_err

    # bf16 MXU path (v6e/v7x feed): check against a reference given the same
    # bf16-rounded conv inputs, so only reduction order / one-pass stats differ.
    out_bf = upblock_forward(x, w, b, gamma, beta, alpha, stride=STRIDE,
                             mxu_dtype=jnp.bfloat16)
    out_bf = jax.block_until_ready(out_bf)
    x_q = x.astype(jnp.bfloat16).astype(jnp.float32)
    w_q = w.astype(jnp.bfloat16).astype(jnp.float32)
    ref_bf = upblock_reference(x_q, w_q, b, gamma, beta, alpha, stride=STRIDE)
    max_err_bf = float(jnp.max(jnp.abs(out_bf - ref_bf)))
    assert jnp.allclose(out_bf, ref_bf, rtol=2e-3, atol=2e-3), max_err_bf

    print("KERNEL_OK")
</pallas_src>

<mosaic_0001>
module attributes {stable_mosaic.version = 11 : i64} {
  func.func @kernel(%arg0: memref<2x8x36xf32, #tpu.memory_space<vmem>>, %arg1: memref<8x168xf32, #tpu.memory_space<vmem>>, %arg2: memref<4x3xf32, #tpu.memory_space<vmem>>, %arg3: memref<8x32xf32, #tpu.memory_space<vmem>>, %arg4: memref<168x32xf32, #tpu.memory_space<vmem>>) attributes {dimension_semantics = [], scalar_prefetch = 0 : i64, scratch_operands = 1 : i64, tpu.core_type = #tpu.core_type<tc>} {
    %c0 = arith.constant 0 : index
    %c0_0 = arith.constant 0 : index
    %c0_1 = arith.constant 0 : index
    %0 = vector.load %arg0[%c0, %c0_0, %c0_1] : memref<2x8x36xf32, #tpu.memory_space<vmem>>, vector<1x8x36xf32>
    %1 = vector.shape_cast %0 : vector<1x8x36xf32> to vector<8x36xf32>
    %c1 = arith.constant 1 : index
    %c0_2 = arith.constant 0 : index
    %c0_3 = arith.constant 0 : index
    %2 = vector.load %arg0[%c1, %c0_2, %c0_3] : memref<2x8x36xf32, #tpu.memory_space<vmem>>, vector<1x8x36xf32>
    %3 = vector.shape_cast %2 : vector<1x8x36xf32> to vector<8x36xf32>
    %4 = vector.extract_strided_slice %1 {offsets = [0, 0], sizes = [8, 16], strides = [1, 1]} : vector<8x36xf32> to vector<8x16xf32>
    %5 = vector.extract_strided_slice %3 {offsets = [0, 0], sizes = [8, 16], strides = [1, 1]} : vector<8x36xf32> to vector<8x16xf32>
    %6 = tpu.concatenate %4, %5 in 1 : vector<8x16xf32>, vector<8x16xf32> -> vector<8x32xf32>
    %c0_4 = arith.constant 0 : index
    %c0_5 = arith.constant 0 : index
    %7 = vector.load %arg4[%c0_4, %c0_5] : memref<168x32xf32, #tpu.memory_space<vmem>>, vector<8x32xf32>
    tpu.vector_store %arg4[%c0_4, %c0_5], %6 {strides = array<i32>} : memref<168x32xf32, #tpu.memory_space<vmem>>, vector<8x32xf32>,
    %8 = vector.extract_strided_slice %1 {offsets = [0, 1], sizes = [8, 16], strides = [1, 1]} : vector<8x36xf32> to vector<8x16xf32>
    %9 = vector.extract_strided_slice %3 {offsets = [0, 1], sizes = [8, 16], strides = [1, 1]} : vector<8x36xf32> to vector<8x16xf32>
    %10 = tpu.concatenate %8, %9 in 1 : vector<8x16xf32>, vector<8x16xf32> -> vector<8x32xf32>
    %c8 = arith.constant 8 : index
    %c0_6 = arith.constant 0 : index
    %11 = vector.load %arg4[%c8, %c0_6] : memref<168x32xf32, #tpu.memory_space<vmem>>, vector<8x32xf32>
    tpu.vector_store %arg4[%c8, %c0_6], %10 {strides = array<i32>} : memref<168x32xf32, #tpu.memory_space<vmem>>, vector<8x32xf32>,
    %12 = vector.extract_strided_slice %1 {offsets = [0, 2], sizes = [8, 16], strides = [1, 1]} : vector<8x36xf32> to vector<8x16xf32>
    %13 = vector.extract_strided_slice %3 {offsets = [0, 2], sizes = [8, 16], strides = [1, 1]} : vector<8x36xf32> to vector<8x16xf32>
    %14 = tpu.concatenate %12, %13 in 1 : vector<8x16xf32>, vector<8x16xf32> -> vector<8x32xf32>
    %c16 = arith.constant 16 : index
    %c0_7 = arith.constant 0 : index
    %15 = vector.load %arg4[%c16, %c0_7] : memref<168x32xf32, #tpu.memory_space<vmem>>, vector<8x32xf32>
    tpu.vector_store %arg4[%c16, %c0_7], %14 {strides = array<i32>} : memref<168x32xf32, #tpu.memory_space<vmem>>, vector<8x32xf32>,
    %16 = vector.extract_strided_slice %1 {offsets = [0, 3], sizes = [8, 16], strides = [1, 1]} : vector<8x36xf32> to vector<8x16xf32>
    %17 = vector.extract_strided_slice %3 {offsets = [0, 3], sizes = [8, 16], strides = [1, 1]} : vector<8x36xf32> to vector<8x16xf32>
    %18 = tpu.concatenate %16, %17 in 1 : vector<8x16xf32>, vector<8x16xf32> -> vector<8x32xf32>
    %c24 = arith.constant 24 : index
    %c0_8 = arith.constant 0 : index
    %19 = vector.load %arg4[%c24, %c0_8] : memref<168x32xf32, #tpu.memory_space<vmem>>, vector<8x32xf32>
    tpu.vector_store %arg4[%c24, %c0_8], %18 {strides = array<i32>} : memref<168x32xf32, #tpu.memory_space<vmem>>, vector<8x32xf32>,
    %20 = vector.extract_strided_slice %1 {offsets = [0, 4], sizes = [8, 16], strides = [1, 1]} : vector<8x36xf32> to vector<8x16xf32>
    %21 = vector.extract_strided_slice %3 {offsets = [0, 4], sizes = [8, 16], strides = [1, 1]} : vector<8x36xf32> to vector<8x16xf32>
    %22 = tpu.concatenate %20, %21 in 1 : vector<8x16xf32>, vector<8x16xf32> -> vector<8x32xf32>
    %c32 = arith.constant 32 : index
    %c0_9 = arith.constant 0 : index
    %23 = vector.load %arg4[%c32, %c0_9] : memref<168x32xf32, #tpu.memory_space<vmem>>, vector<8x32xf32>
    tpu.vector_store %arg4[%c32, %c0_9], %22 {strides = array<i32>} : memref<168x32xf32, #tpu.memory_space<vmem>>, vector<8x32xf32>,
    %24 = vector.extract_strided_slice %1 {offsets = [0, 5], sizes = [8, 16], strides = [1, 1]} : vector<8x36xf32> to vector<8x16xf32>
    %25 = vector.extract_strided_slice %3 {offsets = [0, 5], sizes = [8, 16], strides = [1, 1]} : vector<8x36xf32> to vector<8x16xf32>
    %26 = tpu.concatenate %24, %25 in 1 : vector<8x16xf32>, vector<8x16xf32> -> vector<8x32xf32>
    %c40 = arith.constant 40 : index
    %c0_10 = arith.constant 0 : index
    %27 = vector.load %arg4[%c40, %c0_10] : memref<168x32xf32, #tpu.memory_space<vmem>>, vector<8x32xf32>
    tpu.vector_store %arg4[%c40, %c0_10], %26 {strides = array<i32>} : memref<168x32xf32, #tpu.memory_space<vmem>>, vector<8x32xf32>,
    %28 = vector.extract_strided_slice %1 {offsets = [0, 6], sizes = [8, 16], strides = [1, 1]} : vector<8x36xf32> to vector<8x16xf32>
    %29 = vector.extract_strided_slice %3 {offsets = [0, 6], sizes = [8, 16], strides = [1, 1]} : vector<8x36xf32> to vector<8x16xf32>
    %30 = tpu.concatenate %28, %29 in 1 : vector<8x16xf32>, vector<8x16xf32> -> vector<8x32xf32>
    %c48 = arith.constant 48 : index
    %c0_11 = arith.constant 0 : index
    %31 = vector.load %arg4[%c48, %c0_11] : memref<168x32xf32, #tpu.memory_space<vmem>>, vector<8x32xf32>
    tpu.vector_store %arg4[%c48, %c0_11], %30 {strides = array<i32>} : memref<168x32xf32, #tpu.memory_space<vmem>>, vector<8x32xf32>,
    %32 = vector.extract_strided_slice %1 {offsets = [0, 7], sizes = [8, 16], strides = [1, 1]} : vector<8x36xf32> to vector<8x16xf32>
    %33 = vector.extract_strided_slice %3 {offsets = [0, 7], sizes = [8, 16], strides = [1, 1]} : vector<8x36xf32> to vector<8x16xf32>
    %34 = tpu.concatenate %32, %33 in 1 : vector<8x16xf32>, vector<8x16xf32> -> vector<8x32xf32>
    %c56 = arith.constant 56 : index
    %c0_12 = arith.constant 0 : index
    %35 = vector.load %arg4[%c56, %c0_12] : memref<168x32xf32, #tpu.memory_space<vmem>>, vector<8x32xf32>
    tpu.vector_store %arg4[%c56, %c0_12], %34 {strides = array<i32>} : memref<168x32xf32, #tpu.memory_space<vmem>>, vector<8x32xf32>,
    %36 = vector.extract_strided_slice %1 {offsets = [0, 8], sizes = [8, 16], strides = [1, 1]} : vector<8x36xf32> to vector<8x16xf32>
    %37 = vector.extract_strided_slice %3 {offsets = [0, 8], sizes = [8, 16], strides = [1, 1]} : vector<8x36xf32> to vector<8x16xf32>
    %38 = tpu.concatenate %36, %37 in 1 : vector<8x16xf32>, vector<8x16xf32> -> vector<8x32xf32>
    %c64 = arith.constant 64 : index
    %c0_13 = arith.constant 0 : index
    %39 = vector.load %arg4[%c64, %c0_13] : memref<168x32xf32, #tpu.memory_space<vmem>>, vector<8x32xf32>
    tpu.vector_store %arg4[%c64, %c0_13], %38 {strides = array<i32>} : memref<168x32xf32, #tpu.memory_space<vmem>>, vector<8x32xf32>,
    %40 = vector.extract_strided_slice %1 {offsets = [0, 9], sizes = [8, 16], strides = [1, 1]} : vector<8x36xf32> to vector<8x16xf32>
    %41 = vector.extract_strided_slice %3 {offsets = [0, 9], sizes = [8, 16], strides = [1, 1]} : vector<8x36xf32> to vector<8x16xf32>
    %42 = tpu.concatenate %40, %41 in 1 : vector<8x16xf32>, vector<8x16xf32> -> vector<8x32xf32>
    %c72 = arith.constant 72 : index
    %c0_14 = arith.constant 0 : index
    %43 = vector.load %arg4[%c72, %c0_14] : memref<168x32xf32, #tpu.memory_space<vmem>>, vector<8x32xf32>
    tpu.vector_store %arg4[%c72, %c0_14], %42 {strides = array<i32>} : memref<168x32xf32, #tpu.memory_space<vmem>>, vector<8x32xf32>,
    %44 = vector.extract_strided_slice %1 {offsets = [0, 10], sizes = [8, 16], strides = [1, 1]} : vector<8x36xf32> to vector<8x16xf32>
    %45 = vector.extract_strided_slice %3 {offsets = [0, 10], sizes = [8, 16], strides = [1, 1]} : vector<8x36xf32> to vector<8x16xf32>
    %46 = tpu.concatenate %44, %45 in 1 : vector<8x16xf32>, vector<8x16xf32> -> vector<8x32xf32>
    %c80 = arith.constant 80 : index
    %c0_15 = arith.constant 0 : index
    %47 = vector.load %arg4[%c80, %c0_15] : memref<168x32xf32, #tpu.memory_space<vmem>>, vector<8x32xf32>
    tpu.vector_store %arg4[%c80, %c0_15], %46 {strides = array<i32>} : memref<168x32xf32, #tpu.memory_space<vmem>>, vector<8x32xf32>,
    %48 = vector.extract_strided_slice %1 {offsets = [0, 11], sizes = [8, 16], strides = [1, 1]} : vector<8x36xf32> to vector<8x16xf32>
    %49 = vector.extract_strided_slice %3 {offsets = [0, 11], sizes = [8, 16], strides = [1, 1]} : vector<8x36xf32> to vector<8x16xf32>
    %50 = tpu.concatenate %48, %49 in 1 : vector<8x16xf32>, vector<8x16xf32> -> vector<8x32xf32>
    %c88 = arith.constant 88 : index
    %c0_16 = arith.constant 0 : index
    %51 = vector.load %arg4[%c88, %c0_16] : memref<168x32xf32, #tpu.memory_space<vmem>>, vector<8x32xf32>
    tpu.vector_store %arg4[%c88, %c0_16], %50 {strides = array<i32>} : memref<168x32xf32, #tpu.memory_space<vmem>>, vector<8x32xf32>,
    %52 = vector.extract_strided_slice %1 {offsets = [0, 12], sizes = [8, 16], strides = [1, 1]} : vector<8x36xf32> to vector<8x16xf32>
    %53 = vector.extract_strided_slice %3 {offsets = [0, 12], sizes = [8, 16], strides = [1, 1]} : vector<8x36xf32> to vector<8x16xf32>
    %54 = tpu.concatenate %52, %53 in 1 : vector<8x16xf32>, vector<8x16xf32> -> vector<8x32xf32>
    %c96 = arith.constant 96 : index
    %c0_17 = arith.constant 0 : index
    %55 = vector.load %arg4[%c96, %c0_17] : memref<168x32xf32, #tpu.memory_space<vmem>>, vector<8x32xf32>
    tpu.vector_store %arg4[%c96, %c0_17], %54 {strides = array<i32>} : memref<168x32xf32, #tpu.memory_space<vmem>>, vector<8x32xf32>,
    %56 = vector.extract_strided_slice %1 {offsets = [0, 13], sizes = [8, 16], strides = [1, 1]} : vector<8x36xf32> to vector<8x16xf32>
    %57 = vector.extract_strided_slice %3 {offsets = [0, 13], sizes = [8, 16], strides = [1, 1]} : vector<8x36xf32> to vector<8x16xf32>
    %58 = tpu.concatenate %56, %57 in 1 : vector<8x16xf32>, vector<8x16xf32> -> vector<8x32xf32>
    %c104 = arith.constant 104 : index
    %c0_18 = arith.constant 0 : index
    %59 = vector.load %arg4[%c104, %c0_18] : memref<168x32xf32, #tpu.memory_space<vmem>>, vector<8x32xf32>
    tpu.vector_store %arg4[%c104, %c0_18], %58 {strides = array<i32>} : memref<168x32xf32, #tpu.memory_space<vmem>>, vector<8x32xf32>,
    %60 = vector.extract_strided_slice %1 {offsets = [0, 14], sizes = [8, 16], strides = [1, 1]} : vector<8x36xf32> to vector<8x16xf32>
    %61 = vector.extract_strided_slice %3 {offsets = [0, 14], sizes = [8, 16], strides = [1, 1]} : vector<8x36xf32> to vector<8x16xf32>
    %62 = tpu.concatenate %60, %61 in 1 : vector<8x16xf32>, vector<8x16xf32> -> vector<8x32xf32>
    %c112 = arith.constant 112 : index
    %c0_19 = arith.constant 0 : index
    %63 = vector.load %arg4[%c112, %c0_19] : memref<168x32xf32, #tpu.memory_space<vmem>>, vector<8x32xf32>
    tpu.vector_store %arg4[%c112, %c0_19], %62 {strides = array<i32>} : memref<168x32xf32, #tpu.memory_space<vmem>>, vector<8x32xf32>,
    %64 = vector.extract_strided_slice %1 {offsets = [0, 15], sizes = [8, 16], strides = [1, 1]} : vector<8x36xf32> to vector<8x16xf32>
    %65 = vector.extract_strided_slice %3 {offsets = [0, 15], sizes = [8, 16], strides = [1, 1]} : vector<8x36xf32> to vector<8x16xf32>
    %66 = tpu.concatenate %64, %65 in 1 : vector<8x16xf32>, vector<8x16xf32> -> vector<8x32xf32>
    %c120 = arith.constant 120 : index
    %c0_20 = arith.constant 0 : index
    %67 = vector.load %arg4[%c120, %c0_20] : memref<168x32xf32, #tpu.memory_space<vmem>>, vector<8x32xf32>
    tpu.vector_store %arg4[%c120, %c0_20], %66 {strides = array<i32>} : memref<168x32xf32, #tpu.memory_space<vmem>>, vector<8x32xf32>,
    %68 = vector.extract_strided_slice %1 {offsets = [0, 16], sizes = [8, 16], strides = [1, 1]} : vector<8x36xf32> to vector<8x16xf32>
    %69 = vector.extract_strided_slice %3 {offsets = [0, 16], sizes = [8, 16], strides = [1, 1]} : vector<8x36xf32> to vector<8x16xf32>
    %70 = tpu.concatenate %68, %69 in 1 : vector<8x16xf32>, vector<8x16xf32> -> vector<8x32xf32>
    %c128 = arith.constant 128 : index
    %c0_21 = arith.constant 0 : index
    %71 = vector.load %arg4[%c128, %c0_21] : memref<168x32xf32, #tpu.memory_space<vmem>>, vector<8x32xf32>
    tpu.vector_store %arg4[%c128, %c0_21], %70 {strides = array<i32>} : memref<168x32xf32, #tpu.memory_space<vmem>>, vector<8x32xf32>,
    %72 = vector.extract_strided_slice %1 {offsets = [0, 17], sizes = [8, 16], strides = [1, 1]} : vector<8x36xf32> to vector<8x16xf32>
    %73 = vector.extract_strided_slice %3 {offsets = [0, 17], sizes = [8, 16], strides = [1, 1]} : vector<8x36xf32> to vector<8x16xf32>
    %74 = tpu.concatenate %72, %73 in 1 : vector<8x16xf32>, vector<8x16xf32> -> vector<8x32xf32>
    %c136 = arith.constant 136 : index
    %c0_22 = arith.constant 0 : index
    %75 = vector.load %arg4[%c136, %c0_22] : memref<168x32xf32, #tpu.memory_space<vmem>>, vector<8x32xf32>
    tpu.vector_store %arg4[%c136, %c0_22], %74 {strides = array<i32>} : memref<168x32xf32, #tpu.memory_space<vmem>>, vector<8x32xf32>,
    %76 = vector.extract_strided_slice %1 {offsets = [0, 18], sizes = [8, 16], strides = [1, 1]} : vector<8x36xf32> to vector<8x16xf32>
    %77 = vector.extract_strided_slice %3 {offsets = [0, 18], sizes = [8, 16], strides = [1, 1]} : vector<8x36xf32> to vector<8x16xf32>
    %78 = tpu.concatenate %76, %77 in 1 : vector<8x16xf32>, vector<8x16xf32> -> vector<8x32xf32>
    %c144 = arith.constant 144 : index
    %c0_23 = arith.constant 0 : index
    %79 = vector.load %arg4[%c144, %c0_23] : memref<168x32xf32, #tpu.memory_space<vmem>>, vector<8x32xf32>
    tpu.vector_store %arg4[%c144, %c0_23], %78 {strides = array<i32>} : memref<168x32xf32, #tpu.memory_space<vmem>>, vector<8x32xf32>,
    %80 = vector.extract_strided_slice %1 {offsets = [0, 19], sizes = [8, 16], strides = [1, 1]} : vector<8x36xf32> to vector<8x16xf32>
    %81 = vector.extract_strided_slice %3 {offsets = [0, 19], sizes = [8, 16], strides = [1, 1]} : vector<8x36xf32> to vector<8x16xf32>
    %82 = tpu.concatenate %80, %81 in 1 : vector<8x16xf32>, vector<8x16xf32> -> vector<8x32xf32>
    %c152 = arith.constant 152 : index
    %c0_24 = arith.constant 0 : index
    %83 = vector.load %arg4[%c152, %c0_24] : memref<168x32xf32, #tpu.memory_space<vmem>>, vector<8x32xf32>
    tpu.vector_store %arg4[%c152, %c0_24], %82 {strides = array<i32>} : memref<168x32xf32, #tpu.memory_space<vmem>>, vector<8x32xf32>,
    %84 = vector.extract_strided_slice %1 {offsets = [0, 20], sizes = [8, 16], strides = [1, 1]} : vector<8x36xf32> to vector<8x16xf32>
    %85 = vector.extract_strided_slice %3 {offsets = [0, 20], sizes = [8, 16], strides = [1, 1]} : vector<8x36xf32> to vector<8x16xf32>
    %86 = tpu.concatenate %84, %85 in 1 : vector<8x16xf32>, vector<8x16xf32> -> vector<8x32xf32>
    %c160 = arith.constant 160 : index
    %c0_25 = arith.constant 0 : index
    %87 = vector.load %arg4[%c160, %c0_25] : memref<168x32xf32, #tpu.memory_space<vmem>>, vector<8x32xf32>
    tpu.vector_store %arg4[%c160, %c0_25], %86 {strides = array<i32>} : memref<168x32xf32, #tpu.memory_space<vmem>>, vector<8x32xf32>,
    %c0_26 = arith.constant 0 : index
    %c0_27 = arith.constant 0 : index
    %88 = vector.load %arg4[%c0_26, %c0_27] : memref<168x32xf32, #tpu.memory_space<vmem>>, vector<168x32xf32>
    %c0_28 = arith.constant 0 : index
    %c0_29 = arith.constant 0 : index
    %89 = vector.load %arg1[%c0_28, %c0_29] : memref<8x168xf32, #tpu.memory_space<vmem>>, vector<8x168xf32>
    %cst = arith.constant dense<0.000000e+00> : vector<8x32xf32>
    %90 = tpu.matmul %89, %88, %cst {dimension_numbers = #tpu.dot_dimension_numbers<[1], [0], [0], [1], [0, 0, 1, 1], [], []>} : vector<8x168xf32>, vector<168x32xf32>, vector<8x32xf32> -> vector<8x32xf32>
    %cst_30 = arith.constant dense<0.000000e+00> : vector<8xf32>
    %91 = vector.multi_reduction <add>, %90, %cst_30 [1] : vector<8x32xf32> to vector<8xf32>
    %92 = vector.shape_cast %91 : vector<8xf32> to vector<8x1xf32>
    %93 = arith.mulf %90, %90 : vector<8x32xf32>
    %cst_31 = arith.constant dense<0.000000e+00> : vector<8xf32>
    %94 = vector.multi_reduction <add>, %93, %cst_31 [1] : vector<8x32xf32> to vector<8xf32>
    %95 = vector.shape_cast %94 : vector<8xf32> to vector<8x1xf32>
    %96 = vector.extract_strided_slice %92 {offsets = [0, 0], sizes = [4, 1], strides = [1, 1]} : vector<8x1xf32> to vector<4x1xf32>
    %97 = vector.extract_strided_slice %95 {offsets = [0, 0], sizes = [4, 1], strides = [1, 1]} : vector<8x1xf32> to vector<4x1xf32>
    %98 = vector.extract_strided_slice %92 {offsets = [4, 0], sizes = [4, 1], strides = [1, 1]} : vector<8x1xf32> to vector<4x1xf32>
    %99 = arith.addf %96, %98 : vector<4x1xf32>
    %100 = vector.extract_strided_slice %95 {offsets = [4, 0], sizes = [4, 1], strides = [1, 1]} : vector<8x1xf32> to vector<4x1xf32>
    %101 = arith.addf %97, %100 : vector<4x1xf32>
    %cst_32 = arith.constant 1.562500e-02 : f32
    %102 = vector.broadcast %cst_32 : f32 to vector<4x1xf32>
    %103 = arith.mulf %99, %102 : vector<4x1xf32>
    %cst_33 = arith.constant 1.562500e-02 : f32
    %104 = vector.broadcast %cst_33 : f32 to vector<4x1xf32>
    %105 = arith.mulf %101, %104 : vector<4x1xf32>
    %106 = arith.mulf %103, %103 : vector<4x1xf32>
    %107 = arith.subf %105, %106 : vector<4x1xf32>
    %c0_34 = arith.constant 0 : index
    %c0_35 = arith.constant 0 : index
    %108 = vector.load %arg2[%c0_34, %c0_35] : memref<4x3xf32, #tpu.memory_space<vmem>>, vector<4x1xf32>
    %c0_36 = arith.constant 0 : index
    %c1_37 = arith.constant 1 : index
    %109 = vector.load %arg2[%c0_36, %c1_37] : memref<4x3xf32, #tpu.memory_space<vmem>>, vector<4x1xf32>
    %c0_38 = arith.constant 0 : index
    %c2 = arith.constant 2 : index
    %110 = vector.load %arg2[%c0_38, %c2] : memref<4x3xf32, #tpu.memory_space<vmem>>, vector<4x1xf32>
    %cst_39 = arith.constant 9.99999974E-6 : f32
    %111 = vector.broadcast %cst_39 : f32 to vector<4x1xf32>
    %112 = arith.addf %107, %111 : vector<4x1xf32>
    %113 = math.rsqrt %112 : vector<4x1xf32>
    %114 = arith.mulf %108, %113 : vector<4x1xf32>
    %115 = arith.mulf %114, %103 : vector<4x1xf32>
    %116 = arith.subf %109, %115 : vector<4x1xf32>
    %117 = tpu.concatenate %114, %114 in 0 : vector<4x1xf32>, vector<4x1xf32> -> vector<8x1xf32>
    %118 = tpu.concatenate %116, %116 in 0 : vector<4x1xf32>, vector<4x1xf32> -> vector<8x1xf32>
    %119 = tpu.concatenate %110, %110 in 0 : vector<4x1xf32>, vector<4x1xf32> -> vector<8x1xf32>
    %120 = vector.broadcast %117 : vector<8x1xf32> to vector<8x32xf32>
    %121 = arith.mulf %90, %120 : vector<8x32xf32>
    %122 = vector.broadcast %118 : vector<8x1xf32> to vector<8x32xf32>
    %123 = arith.addf %121, %122 : vector<8x32xf32>
    %cst_40 = arith.constant 0.000000e+00 : f32
    %124 = vector.broadcast %cst_40 : f32 to vector<8x32xf32>
    %125 = arith.cmpf oge, %123, %124 : vector<8x32xf32>
    %126 = vector.broadcast %119 : vector<8x1xf32> to vector<8x32xf32>
    %127 = arith.mulf %126, %123 : vector<8x32xf32>
    %128 = arith.select %125, %123, %127 : vector<8x32xi1>, vector<8x32xf32>
    %c0_41 = arith.constant 0 : index
    %c0_42 = arith.constant 0 : index
    %129 = vector.load %arg3[%c0_41, %c0_42] : memref<8x32xf32, #tpu.memory_space<vmem>>, vector<8x32xf32>
    tpu.vector_store %arg3[%c0_41, %c0_42], %128 {strides = array<i32>} : memref<8x32xf32, #tpu.memory_space<vmem>>, vector<8x32xf32>,
    return
  }
}

</mosaic_0001>

<llo_original>
// kernel: tpu_custom_call.1
$region0: #{tpu_custom_call.1}
  #allocation0 [shape = 'u32[]', space=smem, size = 0x4, offset = 0x4, fixed_abs, tag = 'smem constant byte address 0x4 - core index']
  #allocation1 [shape = 'u32[144,128]{1,0:T(1,128)}', space=vmem, size = 0x12000, scoped, tag = 'internal scratch']
  #allocation2 [shape = 'f32[168,32]{1,0:T(8,128)}', space=vmem, size = 0x15000, scoped, tag = 'scratch operand']
  %s0 = inlined_call_operand.hbm [shape: f32[2,8,36], index: 0, kind: input, shape index: {}]
  %s1 = inlined_call_operand.hbm [shape: f32[8,168], index: 1, kind: input, shape index: {}]
  %s2 = inlined_call_operand.hbm [shape: f32[4,3], index: 2, kind: input, shape index: {}]
  %s3 = inlined_call_operand.hbm [shape: f32[8,32], index: 3, kind: output, shape index: {}]
  %s4 = sld [smem:[#allocation0]]
  $region34: #{tpu_custom_call.1} parent=0
    _
  %s6 = ssub.s32 1, %s4
  %s7 = scalar_select 0, %s6, %s4
  $region1: #{tpu_custom_call.1} parent=0
    #allocation3 [shape = 'u8[8192]{0}', space=vmem, size = 0x2000, scoped, tag = 'input window, operand 0, single buffered']
    #allocation4 [shape = 's32[1]{0}', space=sflag, size = 0x4, scoped, tag = 'scoped memory for tpu_custom_call.1']
    #allocation5 [shape = 's32[1]{0}', space=sflag, size = 0x4, scoped, tag = 'scoped memory for tpu_custom_call.1']
    #allocation6 [shape = 'u8[8192]{0}', space=vmem, size = 0x2000, scoped, tag = 'input window, operand 1, single buffered']
    #allocation7 [shape = 's32[1]{0}', space=sflag, size = 0x4, scoped, tag = 'scoped memory for tpu_custom_call.1']
    #allocation8 [shape = 'u8[2048]{0}', space=vmem, size = 0x800, scoped, tag = 'input window, operand 2, single buffered']
    #allocation9 [shape = 'u8[4096]{0}', space=vmem, size = 0x1000, scoped, tag = 'output window, operand 0, single buffered']
    %8 = vsyncpa [#allocation4], 0
    %9 = vsyncpa [#allocation7], 0
    %10 = vsyncpa [#allocation5], 0
    // Predicated region
    $region2: #{tpu_custom_call.1} parent=1 // pred_check
      _
    $region3: #{tpu_custom_call.1} parent=1 // pred_check_branch
      %12 = sbr.rel (0) target = $region5
    $region4: #{tpu_custom_call.1} parent=1 // pred_region
      %s14 = ssub.s32 256, 256
      %15 = vsyncadd [#allocation4], %s14
      %s16 = sshll.u32 [#allocation3], 4
      %s17 = int_to_ptr.vmem [resolvable:$true] %s16
      %22 = dma.hbm_to_vmem [thread:$0]  %s0, 256, %s17, [#allocation4], 128, 128, 8
    $region5: #{tpu_custom_call.1} parent=1 // pred_fallthru
      _
    // Predicated region
    $region6: #{tpu_custom_call.1} parent=1 // pred_check
      _
    $region7: #{tpu_custom_call.1} parent=1 // pred_check_branch
      %24 = sbr.rel (0) target = $region9
    $region8: #{tpu_custom_call.1} parent=1 // pred_region
      %s26 = ssub.s32 256, 256
      %27 = vsyncadd [#allocation7], %s26
      %s29 = sshll.u32 [#allocation6], 4
      %s30 = int_to_ptr.vmem [resolvable:$true] %s29
      %32 = dma.hbm_to_vmem [thread:$0]  %s1, 256, %s30, [#allocation7]
    $region9: #{tpu_custom_call.1} parent=1 // pred_fallthru
      _
    // Predicated region
    $region10: #{tpu_custom_call.1} parent=1 // pred_check
      _
    $region11: #{tpu_custom_call.1} parent=1 // pred_check_branch
      %34 = sbr.rel (0) target = $region13
    $region12: #{tpu_custom_call.1} parent=1 // pred_region
      %s36 = ssub.s32 64, 64
      %37 = vsyncadd [#allocation7], %s36
      %s39 = sshll.u32 [#allocation8], 4
      %s40 = int_to_ptr.vmem [resolvable:$true] %s39
      %42 = dma.hbm_to_vmem [thread:$0]  %s2, 64, %s40, [#allocation7]
    $region13: #{tpu_custom_call.1} parent=1 // pred_fallthru
      _
    // Predicated region
    $region14: #{tpu_custom_call.1} parent=1 // pred_check
      _
    $region15: #{tpu_custom_call.1} parent=1 // pred_check_branch
      %44 = sbr.rel (0) target = $region17
    $region16: #{tpu_custom_call.1} parent=1 // pred_region
      %45 = dma.done [#allocation4], 256
    $region17: #{tpu_custom_call.1} parent=1 // pred_fallthru
      _
    // Predicated region
    $region18: #{tpu_custom_call.1} parent=1 // pred_check
      _
    $region19: #{tpu_custom_call.1} parent=1 // pred_check_branch
      %47 = sbr.rel (0) target = $region21
    $region20: #{tpu_custom_call.1} parent=1 // pred_region
      %48 = dma.done [#allocation7], 256
    $region21: #{tpu_custom_call.1} parent=1 // pred_fallthru
      _
    // Predicated region
    $region22: #{tpu_custom_call.1} parent=1 // pred_check
      _
    $region23: #{tpu_custom_call.1} parent=1 // pred_check_branch
      %50 = sbr.rel (0) target = $region25
    $region24: #{tpu_custom_call.1} parent=1 // pred_region
      %51 = dma.done [#allocation7], 64
    $region25: #{tpu_custom_call.1} parent=1 // pred_fallthru
      _
    %v52 = vld [vmem:[#allocation3] sm:$0xff]
    %s53 = scalar_lea.vmem [#allocation3], 8
    %v54 = vld [vmem:[%s53] sm:$0xff]
    %56 = vrot.lane.b32.xlu0 %v54, 16
    %v57 = vpop.permute.xlu0 %56
    %vm59 = vcmask 130048
    %v60 = vsel %vm59, %v52, %v57
    %vm61 = vcmask 261120
    %62 = vst.msk [vmem:[#allocation2] sm:$0xff] %vm61, %v60
    %64 = vrot.lane.b32.xlu0 %v52, 127
    %v65 = vpop.permute.xlu0 %64
    %67 = vrot.lane.b32.xlu0 %v54, 15
    %v68 = vpop.permute.xlu0 %67
    %v70 = vsel %vm59, %v65, %v68
    %71 = vst.msk [vmem:[#allocation2 + $0x8] sm:$0xff] %vm61, %v70
    %72 = vrot.lane.b32.xlu0 %v52, 126
    %v73 = vpop.permute.xlu0 %72
    %75 = vrot.lane.b32.xlu0 %v54, 14
    %v76 = vpop.permute.xlu0 %75
    %v78 = vsel %vm59, %v73, %v76
    %79 = vst.msk [vmem:[#allocation2 + $0x10] sm:$0xff] %vm61, %v78
    %80 = vrot.lane.b32.xlu0 %v52, 125
    %v81 = vpop.permute.xlu0 %80
    %83 = vrot.lane.b32.xlu0 %v54, 13
    %v84 = vpop.permute.xlu0 %83
    %v86 = vsel %vm59, %v81, %v84
    %87 = vst.msk [vmem:[#allocation2 + $0x18] sm:$0xff] %vm61, %v86
    %88 = vrot.lane.b32.xlu0 %v52, 124
    %v89 = vpop.permute.xlu0 %88
    %91 = vrot.lane.b32.xlu0 %v54, 12
    %v92 = vpop.permute.xlu0 %91
    %v94 = vsel %vm59, %v89, %v92
    %95 = vst.msk [vmem:[#allocation2 + $0x20] sm:$0xff] %vm61, %v94
    %96 = vrot.lane.b32.xlu0 %v52, 123
    %v97 = vpop.permute.xlu0 %96
    %99 = vrot.lane.b32.xlu0 %v54, 11
    %v100 = vpop.permute.xlu0 %99
    %v102 = vsel %vm59, %v97, %v100
    %103 = vst.msk [vmem:[#allocation2 + $0x28] sm:$0xff] %vm61, %v102
    %104 = vrot.lane.b32.xlu0 %v52, 122
    %v105 = vpop.permute.xlu0 %104
    %107 = vrot.lane.b32.xlu0 %v54, 10
    %v108 = vpop.permute.xlu0 %107
    %v110 = vsel %vm59, %v105, %v108
    %111 = vst.msk [vmem:[#allocation2 + $0x30] sm:$0xff] %vm61, %v110
    %112 = vrot.lane.b32.xlu0 %v52, 121
    %v113 = vpop.permute.xlu0 %112
    %115 = vrot.lane.b32.xlu0 %v54, 9
    %v116 = vpop.permute.xlu0 %115
    %v118 = vsel %vm59, %v113, %v116
    %119 = vst.msk [vmem:[#allocation2 + $0x38] sm:$0xff] %vm61, %v118
    %120 = vrot.lane.b32.xlu0 %v52, 120
    %v121 = vpop.permute.xlu0 %120
    %123 = vrot.lane.b32.xlu0 %v54, 8
    %v124 = vpop.permute.xlu0 %123
    %v126 = vsel %vm59, %v121, %v124
    %127 = vst.msk [vmem:[#allocation2 + $0x40] sm:$0xff] %vm61, %v126
    %128 = vrot.lane.b32.xlu0 %v52, 119
    %v129 = vpop.permute.xlu0 %128
    %131 = vrot.lane.b32.xlu0 %v54, 7
    %v132 = vpop.permute.xlu0 %131
    %v134 = vsel %vm59, %v129, %v132
    %135 = vst.msk [vmem:[#allocation2 + $0x48] sm:$0xff] %vm61, %v134
    %136 = vrot.lane.b32.xlu0 %v52, 118
    %v137 = vpop.permute.xlu0 %136
    %139 = vrot.lane.b32.xlu0 %v54, 6
    %v140 = vpop.permute.xlu0 %139
    %v142 = vsel %vm59, %v137, %v140
    %143 = vst.msk [vmem:[#allocation2 + $0x50] sm:$0xff] %vm61, %v142
    %144 = vrot.lane.b32.xlu0 %v52, 117
    %v145 = vpop.permute.xlu0 %144
    %147 = vrot.lane.b32.xlu0 %v54, 5
    %v148 = vpop.permute.xlu0 %147
    %v150 = vsel %vm59, %v145, %v148
    %151 = vst.msk [vmem:[#allocation2 + $0x58] sm:$0xff] %vm61, %v150
    %152 = vrot.lane.b32.xlu0 %v52, 116
    %v153 = vpop.permute.xlu0 %152
    %155 = vrot.lane.b32.xlu0 %v54, 4
    %v156 = vpop.permute.xlu0 %155
    %v158 = vsel %vm59, %v153, %v156
    %159 = vst.msk [vmem:[#allocation2 + $0x60] sm:$0xff] %vm61, %v158
    %160 = vrot.lane.b32.xlu0 %v52, 115
    %v161 = vpop.permute.xlu0 %160
    %163 = vrot.lane.b32.xlu0 %v54, 3
    %v164 = vpop.permute.xlu0 %163
    %v166 = vsel %vm59, %v161, %v164
    %167 = vst.msk [vmem:[#allocation2 + $0x68] sm:$0xff] %vm61, %v166
    %168 = vrot.lane.b32.xlu0 %v52, 114
    %v169 = vpop.permute.xlu0 %168
    %171 = vrot.lane.b32.xlu0 %v54, 2
    %v172 = vpop.permute.xlu0 %171
    %v174 = vsel %vm59, %v169, %v172
    %175 = vst.msk [vmem:[#allocation2 + $0x70] sm:$0xff] %vm61, %v174
    %176 = vrot.lane.b32.xlu0 %v52, 113
    %v177 = vpop.permute.xlu0 %176
    %179 = vrot.lane.b32.xlu0 %v54, 1
    %v180 = vpop.permute.xlu0 %179
    %v182 = vsel %vm59, %v177, %v180
    %183 = vst.msk [vmem:[#allocation2 + $0x78] sm:$0xff] %vm61, %v182
    %184 = vrot.lane.b32.xlu0 %v52, 112
    %v185 = vpop.permute.xlu0 %184
    %v187 = vsel %vm59, %v185, %v54
    %188 = vst.msk [vmem:[#allocation2 + $0x80] sm:$0xff] %vm61, %v187
    %189 = vrot.lane.b32.xlu0 %v52, 111
    %v190 = vpop.permute.xlu0 %189
    %192 = vrot.lane.b32.xlu0 %v54, 127
    %v193 = vpop.permute.xlu0 %192
    %v195 = vsel %vm59, %v190, %v193
    %196 = vst.msk [vmem:[#allocation2 + $0x88] sm:$0xff] %vm61, %v195
    %197 = vrot.lane.b32.xlu0 %v52, 110
    %v198 = vpop.permute.xlu0 %197
    %200 = vrot.lane.b32.xlu0 %v54, 126
    %v201 = vpop.permute.xlu0 %200
    %v203 = vsel %vm59, %v198, %v201
    %204 = vst.msk [vmem:[#allocation2 + $0x90] sm:$0xff] %vm61, %v203
    %205 = vrot.lane.b32.xlu0 %v52, 109
    %v206 = vpop.permute.xlu0 %205
    %208 = vrot.lane.b32.xlu0 %v54, 125
    %v209 = vpop.permute.xlu0 %208
    %v211 = vsel %vm59, %v206, %v209
    %212 = vst.msk [vmem:[#allocation2 + $0x98] sm:$0xff] %vm61, %v211
    %213 = vrot.lane.b32.xlu0 %v52, 108
    %v214 = vpop.permute.xlu0 %213
    %216 = vrot.lane.b32.xlu0 %v54, 124
    %v217 = vpop.permute.xlu0 %216
    %v219 = vsel %vm59, %v214, %v217
    %220 = vst.msk [vmem:[#allocation2 + $0xa0] sm:$0xff] %vm61, %v219
    %v221 = vld [vmem:[#allocation2] sm:$0xff]
    %v222 = vld [vmem:[#allocation2 + $0x8] sm:$0xff]
    %v223 = vld [vmem:[#allocation2 + $0x10] sm:$0xff]
    %v224 = vld [vmem:[#allocation2 + $0x18] sm:$0xff]
    %v225 = vld [vmem:[#allocation2 + $0x20] sm:$0xff]
    %v226 = vld [vmem:[#allocation2 + $0x28] sm:$0xff]
    %v227 = vld [vmem:[#allocation2 + $0x30] sm:$0xff]
    %v228 = vld [vmem:[#allocation2 + $0x38] sm:$0xff]
    %v229 = vld [vmem:[#allocation2 + $0x40] sm:$0xff]
    %v230 = vld [vmem:[#allocation2 + $0x48] sm:$0xff]
    %v231 = vld [vmem:[#allocation2 + $0x50] sm:$0xff]
    %v232 = vld [vmem:[#allocation2 + $0x58] sm:$0xff]
    %v233 = vld [vmem:[#allocation2 + $0x60] sm:$0xff]
    %v234 = vld [vmem:[#allocation2 + $0x68] sm:$0xff]
    %v235 = vld [vmem:[#allocation2 + $0x70] sm:$0xff]
    %v236 = vld [vmem:[#allocation2 + $0x78] sm:$0xff]
    %v237 = vld [vmem:[#allocation2 + $0x80] sm:$0xff]
    %v238 = vld [vmem:[#allocation2 + $0x88] sm:$0xff]
    %v239 = vld [vmem:[#allocation2 + $0x90] sm:$0xff]
    %v240 = vld [vmem:[#allocation2 + $0x98] sm:$0xff]
    %v241 = vld [vmem:[#allocation2 + $0xa0] sm:$0xff]
    %v242 = vld [vmem:[#allocation6] sm:$0xff]
    %v243 = vld [vmem:[#allocation6 + $0x8] sm:$0xff]
    %vm244 = vcmask 326656
    %v246 = vsel %vm244, %v243, 0
    %248 = vmatprep.subr.mxu0 0.0
    %249 = vmatpush1.msra.mxu0 %v236
    %250 = vmatprep.subr.mxu0 0.0
    %251 = vmatpush1.msra.mxu0 %v235
    %252 = vmatprep.subr.mxu0 0.0
    %253 = vmatpush1.msra.mxu0 %v234
    %254 = vmatprep.subr.mxu0 0.0
    %255 = vmatpush1.msra.mxu0 %v233
    %256 = vmatprep.subr.mxu0 0.0
    %257 = vmatpush1.msra.mxu0 %v232
    %258 = vmatprep.subr.mxu0 0.0
    %259 = vmatpush1.msra.mxu0 %v231
    %260 = vmatprep.subr.mxu0 0.0
    %261 = vmatpush1.msra.mxu0 %v230
    %262 = vmatprep.subr.mxu0 0.0
    %263 = vmatpush1.msra.mxu0 %v229
    %264 = vmatprep.subr.mxu0 0.0
    %265 = vmatpush1.msra.mxu0 %v228
    %266 = vmatprep.subr.mxu0 0.0
    %267 = vmatpush1.msra.mxu0 %v227
    %268 = vmatprep.subr.mxu0 0.0
    %269 = vmatpush1.msra.mxu0 %v226
    %270 = vmatprep.subr.mxu0 0.0
    %271 = vmatpush1.msra.mxu0 %v225
    %272 = vmatprep.subr.mxu0 0.0
    %273 = vmatpush1.msra.mxu0 %v224
    %274 = vmatprep.subr.mxu0 0.0
    %275 = vmatpush1.msra.mxu0 %v223
    %276 = vmatprep.subr.mxu0 0.0
    %277 = vmatpush1.msra.mxu0 %v222
    %278 = vmatprep.subr.mxu0 0.0
    %279 = vmatpush1.msra.mxu0 %v221
    %280 = vmatprep.subr.mxu0 0.0
    %281 = vmatpush2.msra.mxu0 0.0
    %282 = vmatprep.subr.mxu0 0.0
    %283 = vmatpush2.msra.mxu0 0.0
    %284 = vmatprep.subr.mxu0 0.0
    %285 = vmatpush2.msra.mxu0 0.0
    %286 = vmatprep.subr.mxu0 0.0
    %287 = vmatpush2.msra.mxu0 0.0
    %288 = vmatprep.subr.mxu0 0.0
    %289 = vmatpush2.msra.mxu0 0.0
    %290 = vmatprep.subr.mxu0 0.0
    %291 = vmatpush2.msra.mxu0 0.0
    %292 = vmatprep.subr.mxu0 0.0
    %293 = vmatpush2.msra.mxu0 0.0
    %294 = vmatprep.subr.mxu0 0.0
    %295 = vmatpush2.msra.mxu0 0.0
    %296 = vmatprep.subr.mxu0 0.0
    %297 = vmatpush2.msra.mxu0 0.0
    %298 = vmatprep.subr.mxu0 0.0
    %299 = vmatpush2.msra.mxu0 0.0
    %300 = vmatprep.subr.mxu0 0.0
    %301 = vmatpush2.msra.mxu0 0.0
    %302 = vmatprep.subr.mxu0 0.0
    %303 = vmatpush2.msra.mxu0 %v241
    %304 = vmatprep.subr.mxu0 0.0
    %305 = vmatpush2.msra.mxu0 %v240
    %306 = vmatprep.subr.mxu0 0.0
    %307 = vmatpush2.msra.mxu0 %v239
    %308 = vmatprep.subr.mxu0 0.0
    %309 = vmatpush2.msra.mxu0 %v238
    %310 = vmatprep.subr.mxu0 0.0
    %311 = vmatpush2.msra.mxu0 %v237
    %312 = vmatprep.mubr.f32.mxu0 %v246
    %313 = vmatmul.mubr.f32.gmra.mxu0 %v242
    %v314 = vpop.f32.mrf.mxu0
    %v315 = vadd.f32 0.0, %v314
    %v316 = vpop.f32.mrf.mxu0
    %317 = vdwg.mxu0
    %v318 = vsel %vm61, %v315, 0.0
    %319 = vadd.xlane.f32.xlu0 %v318
    %v320 = vpop.xlane.xlu0 %319
    %v321 = vmul.f32 %v315, %v315
    %v322 = vsel %vm61, %v321, 0.0
    %323 = vadd.xlane.f32.xlu0 %v322
    %v324 = vpop.xlane.xlu0 %323
    %v326 = vrot.slane %v320, 4
    %v328 = vadd.f32 %v320, %v326
    %v330 = vrot.slane %v324, 4
    %v332 = vadd.f32 %v324, %v330
    %v333 = vmul.f32 %v328, 0.015625
    %v334 = vmul.f32 %v332, 0.015625
    %v335 = vmul.f32 %v333, %v333
    %v336 = vsub.f32 %v334, %v335
    %v337 = vld [vmem:[#allocation8] sm:$0xf]
    %v338 = vadd.f32 %v336, 1e-05
    %v339 = vrsqrt.pop %v338
    %v340 = vmul.f32 %v337, %v339
    %v341 = vmul.f32 %v340, %v333
    %343 = vrot.lane.b32.xlu0 %v341, 1
    %v344 = vpop.permute.xlu0 %343
    %v346 = vsub.f32 %v337, %v344
    %v348 = vrot.slane %v340, 4
    %vm350 = vcmask 1043456
    %v351 = vsel %vm350, %v340, %v348
    %v353 = vrot.slane %v346, 4
    %v355 = vsel %vm350, %v346, %v353
    %v357 = vrot.slane %v337, 4
    %v359 = vsel %vm350, %v337, %v357
    %361 = vset.pattern.permute.xlu0 0
    %362 = vperm.xlu0 %361, %v351
    %v363 = vpop.permute.xlu0 %362
    %v365 = vmul.f32 %v315, %v363
    %367 = vset.pattern.permute.xlu0 1
    %368 = vperm.xlu0 %367, %v355
    %v369 = vpop.permute.xlu0 %368
    %v371 = vadd.f32 %v365, %v369
    %vm372 = vcmp.ge.f32.partialorder %v371, 0.0
    %374 = vset.pattern.permute.xlu0 2
    %375 = vperm.xlu0 %374, %v359
    %v376 = vpop.permute.xlu0 %375
    %v378 = vmul.f32 %v376, %v371
    %v379 = vsel %vm372, %v371, %v378
    %380 = vst.msk [vmem:[#allocation9] sm:$0xff] %vm61, %v379
    // Predicated region
    $region26: #{tpu_custom_call.1} parent=1 // pred_check
      _
    $region27: #{tpu_custom_call.1} parent=1 // pred_check_branch
      %382 = sbr.rel (0) target = $region29
    $region28: #{tpu_custom_call.1} parent=1 // pred_region
      %s384 = ssub.s32 128, 128
      %385 = vsyncadd [#allocation5], %s384
      %s387 = sshll.u32 [#allocation9], 4
      %s388 = int_to_ptr.vmem [resolvable:$true] %s387
      %390 = dma.vmem_to_hbm [thread:$0]  %s388, 128, %s3, [#allocation5]
    $region29: #{tpu_custom_call.1} parent=1 // pred_fallthru
      _
    // Predicated region
    $region30: #{tpu_custom_call.1} parent=1 // pred_check
      _
    $region31: #{tpu_custom_call.1} parent=1 // pred_check_branch
      %392 = sbr.rel (0) target = $region33
    $region32: #{tpu_custom_call.1} parent=1 // pred_region
      %393 = dma.done [#allocation5], 128
    $region33: #{tpu_custom_call.1} parent=1 // pred_fallthru
      _
    %394 = vsyncpa [#allocation4], 1
    %395 = vsyncpa [#allocation7], 1
    %396 = vsyncpa [#allocation5], 1

</llo_original>
